<compile_context>
chip_gen: v6e
topology: v6e:2x2x1
jax: 0.10.0
libtpu: 0.0.40
codegen_flags: <defaults>
</compile_context>

<pallas_src>
import jax
import jax.numpy as jnp
from jax.experimental import pallas as pl
from jax.experimental.pallas import tpu as pltpu

_LANE = 128                      # vreg lane width
_SMALL_COPY_BYTES = 512 << 10    # below this, XLA's fused copy beats a custom call


# ----------------------------------------------------------------------------
# Forward (module semantics): pure identity.
# ----------------------------------------------------------------------------
def identity_encoder_forward(obs_prop: jax.Array) -> jax.Array:
    """IdentityEncoder.forward(obs_prop): return the input unchanged."""
    return obs_prop


# ----------------------------------------------------------------------------
# Path 1 — single HBM->HBM DMA (preferred materialized copy).
# ----------------------------------------------------------------------------
def _dma_copy_kernel(x_hbm_ref, o_hbm_ref, sem):
    copy = pltpu.make_async_copy(x_hbm_ref, o_hbm_ref, sem)
    copy.start()
    copy.wait()


def _identity_copy_dma(x: jax.Array) -> jax.Array:
    """Materialized copy via one HBM->HBM DMA descriptor (any shape/dtype)."""
    return pl.pallas_call(
        _dma_copy_kernel,
        out_shape=jax.ShapeDtypeStruct(x.shape, x.dtype),
        in_specs=[pl.BlockSpec(memory_space=pl.ANY)],
        out_specs=pl.BlockSpec(memory_space=pl.ANY),
        scratch_shapes=[pltpu.SemaphoreType.DMA],
    )(x)


# ----------------------------------------------------------------------------
# Path 2 — tiled VMEM copy (optional; lane-dense, dtype/chip-aware tiling).
# ----------------------------------------------------------------------------
def _tile_copy_kernel(x_ref, o_ref):
    o_ref[...] = x_ref[...]


def _sublane_for(dtype) -> int:
    """Native sublane granularity: 8 (f32), 16 (bf16), 32 (int8/fp8)."""
    itemsize = jnp.dtype(dtype).itemsize
    return max(8, 32 // max(itemsize, 1))


def _vmem_capacity_bytes() -> int:
    """Physical VMEM for this generation; conservative fallback = v7x (64 MiB)."""
    try:
        return int(pltpu.get_tpu_info().vmem_capacity_bytes)
    except Exception:
        return 64 << 20


def _lane_dense_2d(x: jax.Array, max_lanes: int) -> jax.Array:
    """View x as (rows, lanes) with the widest 128-multiple last dim possible."""
    n = x.size
    d = _LANE
    while d * 2 <= max_lanes and n % (d * 2) == 0:
        d *= 2
    return x.reshape(n // d, d)


def _choose_tile_rows(rows: int, row_bytes: int, target_bytes: int,
                      sublane: int) -> int:
    """Largest sublane-multiple row tile under the byte budget, preferring a
    divisor of `rows` (no ragged block) and guaranteeing >=2 grid blocks when
    possible (so v7x's two TensorCores can split the copy)."""
    if rows <= sublane:
        return rows  # full-extent block is always legal
    t = (target_bytes // max(row_bytes, 1)) // sublane * sublane
    t = max(sublane, min(t, rows))
    # Guarantee >= 2 grid blocks for megacore sharding.
    if t >= rows and rows >= 2 * sublane:
        t = max(sublane, (rows // 2) // sublane * sublane)
    # Prefer an even split (divisor of rows) under the same cap.
    cand = t
    while cand > sublane and rows % cand:
        cand -= sublane
    return cand if rows % cand == 0 else t


def _identity_copy_tiled(x: jax.Array,
                         *,
                         tile_rows: int | None = None,
                         max_lanes: int = 32768,
                         target_tile_bytes: int | None = None) -> jax.Array:
    """Materialized copy via the pipelined VMEM path (lane-aligned sizes only)."""
    if x.size % _LANE != 0:
        # Narrow / unaligned last dims would lower to masked vst.msk stores;
        # the single-DMA path is strictly better there.
        return _identity_copy_dma(x)

    orig_shape = x.shape
    x2 = _lane_dense_2d(x, max_lanes)
    rows, lanes = x2.shape
    itemsize = x2.dtype.itemsize
    sublane = _sublane_for(x2.dtype)

    cap = _vmem_capacity_bytes()
    if target_tile_bytes is None:
        # 4x (in+out double-buffered) footprint capped at ~3/8 of physical VMEM:
        # ~6 MiB tiles on v7x (64 MiB), ~12 MiB on v5e/v6e (128 MiB).
        target_tile_bytes = (cap * 3 // 8) // 4
    if tile_rows is None:
        tile_rows = _choose_tile_rows(rows, lanes * itemsize,
                                      target_tile_bytes, sublane)
    tile_rows = max(1, min(tile_rows, rows))

    tile_bytes = tile_rows * lanes * itemsize
    vmem_limit = int(min(cap // 2, max(32 << 20, 4 * tile_bytes + (4 << 20))))

    out2 = pl.pallas_call(
        _tile_copy_kernel,
        out_shape=jax.ShapeDtypeStruct((rows, lanes), x2.dtype),
        grid=(pl.cdiv(rows, tile_rows),),
        in_specs=[pl.BlockSpec((tile_rows, lanes), lambda i: (i, 0))],
        out_specs=pl.BlockSpec((tile_rows, lanes), lambda i: (i, 0)),
        compiler_params=pltpu.CompilerParams(
            dimension_semantics=("parallel",),
            vmem_limit_bytes=vmem_limit),
    )(x2)
    return out2.reshape(orig_shape)


# ----------------------------------------------------------------------------
# Dispatcher for a materialized copy.
# ----------------------------------------------------------------------------
def identity_encoder_copy(obs_prop: jax.Array,
                          *,
                          method: str = "auto",
                          tile_rows: int | None = None,
                          max_lanes: int = 32768) -> jax.Array:
    """Materialized identity copy. method: 'auto' | 'dma' | 'tiled'."""
    if obs_prop.size == 0:
        return obs_prop
    if method == "dma":
        return _identity_copy_dma(obs_prop)
    if method == "tiled":
        return _identity_copy_tiled(obs_prop, tile_rows=tile_rows,
                                    max_lanes=max_lanes)
    # auto: small buffers -> XLA native copy (launch overhead dominates a
    # custom call); everything else -> single HBM->HBM DMA (a pure copy has
    # nothing to overlap, so the staged VMEM round trip buys nothing).
    if obs_prop.size * obs_prop.dtype.itemsize < _SMALL_COPY_BYTES:
        return jnp.copy(obs_prop)
    return _identity_copy_dma(obs_prop)


class IdentityEncoder:
    """JAX counterpart of the PyTorch IdentityEncoder (no parameters)."""

    def __init__(self, obs_prop_dim: int):
        self.repr_prop_dim = obs_prop_dim

    def __call__(self, obs_prop: jax.Array) -> jax.Array:
        return identity_encoder_forward(obs_prop)


if __name__ == "__main__":
    k0, k1, k2 = jax.random.split(jax.random.PRNGKey(0), 3)

    # Small proprioceptive observation, matching the module's (B, D) input.
    batch, obs_prop_dim = 2, 32
    obs_prop = jax.random.normal(k0, (batch, obs_prop_dim), dtype=jnp.float32)

    enc = IdentityEncoder(obs_prop_dim)

    # 1) Default (fast) forward path: identity is free — input returned directly.
    out_fast = jax.block_until_ready(enc(obs_prop))
    assert out_fast.shape == obs_prop.shape and out_fast.dtype == obs_prop.dtype
    assert bool(jnp.all(out_fast == obs_prop))
    assert enc.repr_prop_dim == obs_prop_dim

    # 2) Materialized copy, forced DMA path (works for any shape, incl. D=32).
    out_dma = jax.block_until_ready(identity_encoder_copy(obs_prop, method="dma"))
    assert out_dma.shape == obs_prop.shape and out_dma.dtype == obs_prop.dtype
    assert bool(jnp.all(out_dma == obs_prop))

    # 3) Tiled lane-dense path, multi-block grid: (64, 128) f32, 16-row tiles
    #    -> grid=(4,), unmasked full-lane stores, even split.
    big = jax.random.normal(k1, (64, 128), dtype=jnp.float32)
    out_big = jax.block_until_ready(
        identity_encoder_copy(big, method="tiled", tile_rows=16, max_lanes=128))
    assert out_big.shape == big.shape
    assert bool(jnp.all(out_big == big))

    # 4) Tiled path with a ragged final block: (40, 256) f32, 16-row tiles
    #    -> grid=(3,), last block partially masked; must remain bit-exact.
    ragged = jax.random.normal(k2, (40, 256), dtype=jnp.float32)
    out_ragged = jax.block_until_ready(
        identity_encoder_copy(ragged, method="tiled", tile_rows=16, max_lanes=256))
    assert out_ragged.shape == ragged.shape
    assert bool(jnp.all(out_ragged == ragged))

    # 5) Auto dispatch on the tiny demo input (small-size gate -> XLA copy).
    out_auto = jax.block_until_ready(identity_encoder_copy(obs_prop))
    assert bool(jnp.all(out_auto == obs_prop))

    print("KERNEL_OK")
</pallas_src>

<mosaic_0001>
module attributes {stable_mosaic.version = 11 : i64} {
  func.func @_dma_copy_kernel(%arg0: memref<2x32xf32, #tpu.memory_space<any>>, %arg1: memref<2x32xf32, #tpu.memory_space<any>>, %arg2: memref<!tpu.dma_semaphore, #tpu.memory_space<semaphore_mem>>) attributes {dimension_semantics = [], scalar_prefetch = 0 : i64, scratch_operands = 1 : i64, tpu.core_type = #tpu.core_type<tc>} {
    tpu.enqueue_dma source(%arg0 : memref<2x32xf32, #tpu.memory_space<any>>) target(%arg1 : memref<2x32xf32, #tpu.memory_space<any>>) target_semaphore(%arg2 : memref<!tpu.dma_semaphore, #tpu.memory_space<semaphore_mem>>)
    tpu.wait_dma2 semaphore(%arg2 : memref<!tpu.dma_semaphore, #tpu.memory_space<semaphore_mem>>) src(%arg0 : memref<2x32xf32, #tpu.memory_space<any>>) dst(%arg1 : memref<2x32xf32, #tpu.memory_space<any>>)
    return
  }
}

</mosaic_0001>

<llo_original>
// kernel: tpu_custom_call.1
$region0: #{tpu_custom_call.1}
  #allocation0 [shape = 'u32[]', space=smem, size = 0x4, offset = 0x4, fixed_abs, tag = 'smem constant byte address 0x4 - core index']
  #allocation1 [shape = 'u32[144,128]{1,0:T(1,128)}', space=vmem, size = 0x12000, scoped, tag = 'internal scratch']
  #allocation2 [shape = 's32[1]{0}', space=sflag, size = 0x4, scoped, tag = 'scratch operand']
  #allocation3 [shape = 's32[]', space=sflag, size = 0x4, offset = 0, fixed_abs, tag = 'sflag constant byte address 0x0 - dummy sync flag']
  #allocation4 [shape = 'u32[0]{0}', space=smem, size = 0, offset = 0, fixed_abs, tag = 'smem constant byte address 0x0 - null']
  %s0 = inlined_call_operand.hbm [shape: f32[2,32], index: 0, kind: input, shape index: {}]
  %s1 = inlined_call_operand.hbm [shape: f32[2,32], index: 1, kind: output, shape index: {}]
  %s2 = sld [smem:[#allocation0]]
  $region2: #{tpu_custom_call.1} parent=0
    _
  %s4 = ssub.s32 1, %s2
  %s5 = scalar_select 0, %s4, %s2
  %s7 = sshll.u32 1, 14
  %s8 = sxor.u32 4294967295, %s7
  %12 = dma.general %s0, 32, %s1, [#allocation2], 131072, [#allocation4], 0, 0
  %s13 = smul.u32 2, 1
  %s14 = sshll.u32 %s13, 4
  %15 = dma.done [#allocation2], %s14
  %16 = vsyncmov [#allocation2]
  %s17 = vpop.sfrf %16
  %p18 = scmp.eq.s32.totalorder %s17, 0
  %p19 = pneg %p18
  %21 = shalt.err (%p19)

</llo_original>
